<compile_context>
chip_gen: v5e
topology: v5e:2x2
jax: 0.10.0
libtpu: 0.0.40
codegen_flags: <defaults>
</compile_context>

<pallas_src>
import functools

import numpy as np

import jax
import jax.numpy as jnp
from jax import lax
from jax.experimental import pallas as pl
from jax.experimental.pallas import tpu as pltpu

EPS = 1e-5


def resblock_kernel(x_ref, wb1_ref, wb2_ref, p_ref,
                    g1_ref, b1_ref, g2_ref, b2_ref, out_ref, *, conv_dtype):
    # x_ref:       (N, HP, L)   activations, lane axis L = R*W*C (128 here)
    # wb*_ref:     (3, L, L)    block-banded conv weights (per packed-row tap)
    # p_ref:       (L, L)       group-averaging matrix (1/NHW where same channel)
    # g*/b*_ref:   (1, L)       BN gamma/beta, already lane-broadcast
    # out_ref:     (N*HP, L)    lane-dense output
    N, HP, L = x_ref.shape
    rows = N * HP
    f32 = jnp.float32

    x = x_ref[...]                                      # single input read
    zrow = jnp.zeros((N, 1, L), f32)

    def conv3x3(v, wb_ref):
        # v: (N, HP, L) value.  Height halo = one zero packed row each side;
        # kw taps + width padding are folded into the banded weight, so each
        # conv is just 3 accumulated (rows, L) x (L, L) MXU matmuls.
        vp = jnp.concatenate([zrow, v, zrow], axis=1)   # (N, HP+2, L)
        acc = jnp.zeros((rows, L), f32)
        for dp in range(3):                             # static unroll
            tap = vp[:, dp:dp + HP, :].reshape(rows, L)
            acc = acc + jnp.dot(tap.astype(conv_dtype), wb_ref[dp],
                                preferred_element_type=f32)
        return acc

    def batchnorm(y, g_ref, b_ref):
        # One-pass batch statistics (biased variance, PyTorch train-mode BN).
        s = jnp.sum(y, axis=0, keepdims=True)           # (1, L)
        ss = jnp.sum(y * y, axis=0, keepdims=True)      # (1, L)
        stats = jnp.concatenate([s, ss], axis=0)        # (2, L)
        red = jnp.dot(stats, p_ref[...], preferred_element_type=f32)  # (2, L)
        mean = red[0:1, :]
        ex2 = red[1:2, :]
        var = jnp.maximum(ex2 - mean * mean, 0.0)
        scale = g_ref[...] * lax.rsqrt(var + EPS)       # rsqrt -> EUP (free slot)
        shift = b_ref[...] - mean * scale
        return y * scale + shift

    # ---- conv1 -> BN1 -> ReLU (y1 stays a value; no scratch writeback) ----
    y1 = jnp.maximum(batchnorm(conv3x3(x, wb1_ref), g1_ref, b1_ref), 0.0)

    # ---- conv2 -> BN2 -> +residual -> ReLU ----
    y2 = batchnorm(conv3x3(y1.reshape(N, HP, L), wb2_ref), g2_ref, b2_ref)
    y2 = y2 + x.reshape(rows, L)
    out_ref[...] = jnp.maximum(y2, 0.0)                 # full-lane store


def _banded_weights(w_hwio, W, R):
    """Fold the 3x3 conv taps (kh, kw) and the width zero-padding into three
    block-banded matmul weights over a lane axis that packs R spatial rows.
    Returns (3, R*W*Cin, R*W*Cout); tap index dp corresponds to reading the
    packed input row p + dp - 1."""
    KH, KW, Cin, Cout = w_hwio.shape
    hi = np.arange(R)[:, None]     # packed-row-local input row
    ho = np.arange(R)[None, :]     # packed-row-local output row
    wi = np.arange(W)[:, None]     # input width
    wo = np.arange(W)[None, :]     # output width
    kw = (wi - wo) + KW // 2
    wmask = (kw >= 0) & (kw < KW)                        # width zero padding
    kwc = np.clip(kw, 0, KW - 1)
    mats = []
    for dp in (-1, 0, 1):
        kh = (R * dp + hi - ho) + KH // 2
        hmask = (kh >= 0) & (kh < KH)
        khc = np.clip(kh, 0, KH - 1)
        # gather -> (hi, wi, ho, wo, ci, co)
        t = w_hwio[khc[:, None, :, None], kwc[None, :, None, :]]
        m = hmask[:, None, :, None] & wmask[None, :, None, :]
        t = t * jnp.asarray(m[..., None, None], dtype=w_hwio.dtype)
        t = jnp.transpose(t, (0, 1, 4, 2, 3, 5))         # (hi, wi, ci, ho, wo, co)
        mats.append(t.reshape(R * W * Cin, R * W * Cout))
    return jnp.stack(mats, axis=0)


def resblock_pallas(x_nhwc, w1_hwio, w2_hwio, g1, b1, g2, b2,
                    *, conv_dtype=jnp.float32, lane_target=128):
    N, H, W, C = x_nhwc.shape
    assert w1_hwio.shape[-1] == C and w2_hwio.shape[-1] == C, \
        "residual add requires Cin == Cout (stride-1 ResBlock)"
    WC = W * C

    # Pack R rows into the lane axis so L = R*W*C hits the lane target (128):
    # dense vregs / stores and K = N = 128 conv matmuls.
    if WC >= lane_target or lane_target % WC != 0:
        R = 1
    else:
        R = lane_target // WC
        while R > 1 and H % R != 0:
            R //= 2
    HP = H // R
    L = R * WC
    rows = N * HP
    nhw = N * H * W

    wb1 = _banded_weights(w1_hwio, W, R).astype(conv_dtype)   # (3, L, L)
    wb2 = _banded_weights(w2_hwio, W, R).astype(conv_dtype)

    # Group-averaging matrix: lane l carries channel l % C.
    lanes = np.arange(L)
    P = jnp.asarray((lanes[:, None] % C == lanes[None, :] % C),
                    dtype=jnp.float32) / float(nhw)           # (L, L)

    # gamma/beta pre-broadcast to lanes in the wrapper (no in-kernel iota).
    g1l = jnp.tile(g1.astype(jnp.float32), R * W).reshape(1, L)
    b1l = jnp.tile(b1.astype(jnp.float32), R * W).reshape(1, L)
    g2l = jnp.tile(g2.astype(jnp.float32), R * W).reshape(1, L)
    b2l = jnp.tile(b2.astype(jnp.float32), R * W).reshape(1, L)

    x_packed = x_nhwc.reshape(N, HP, L)                       # free reshape

    vmem = pl.BlockSpec(memory_space=pltpu.MemorySpace.VMEM)
    wbytes = jnp.dtype(conv_dtype).itemsize
    flops = 2 * 3 * 2 * rows * L * L + 2 * 2 * 2 * L * L      # banded-matmul flops
    bytes_accessed = (4 * (x_packed.size + rows * L + P.size + 4 * L)
                      + wbytes * (wb1.size + wb2.size))

    out = pl.pallas_call(
        functools.partial(resblock_kernel, conv_dtype=conv_dtype),
        out_shape=jax.ShapeDtypeStruct((rows, L), jnp.float32),
        in_specs=[vmem] * 8,
        out_specs=vmem,
        compiler_params=pltpu.CompilerParams(
            # tiny kernel: explicit budget, well inside v7x's 64 MiB VMEM
            vmem_limit_bytes=32 * 1024 * 1024),
        cost_estimate=pl.CostEstimate(
            flops=flops, transcendentals=2 * L, bytes_accessed=bytes_accessed),
    )(x_packed, wb1, wb2, P, g1l, b1l, g2l, b2l)
    return out.reshape(N, H, W, C)


@jax.jit
def resblock_nchw(x_nchw, w1_oihw, w2_oihw, g1, b1, g2, b2):
    """PyTorch-convention interface: NCHW activations, OIHW conv weights."""
    x_nhwc = jnp.transpose(x_nchw, (0, 2, 3, 1))
    w1_hwio = jnp.transpose(w1_oihw, (2, 3, 1, 0))
    w2_hwio = jnp.transpose(w2_oihw, (2, 3, 1, 0))
    y = resblock_pallas(x_nhwc, w1_hwio, w2_hwio, g1, b1, g2, b2)
    return jnp.transpose(y, (0, 3, 1, 2))


def resblock_reference_nchw(x, w1, w2, g1, b1, g2, b2):
    """Pure-JAX reference with PyTorch training-mode BN semantics (NCHW/OIHW)."""
    def conv(a, w):
        return lax.conv_general_dilated(
            a, w, window_strides=(1, 1), padding="SAME",
            dimension_numbers=("NCHW", "OIHW", "NCHW"))

    def bn(y, g, b):
        m = jnp.mean(y, axis=(0, 2, 3), keepdims=True)
        v = jnp.mean((y - m) ** 2, axis=(0, 2, 3), keepdims=True)
        return (y - m) * lax.rsqrt(v + EPS) * g.reshape(1, -1, 1, 1) \
            + b.reshape(1, -1, 1, 1)

    y = jax.nn.relu(bn(conv(x, w1), g1, b1))
    y = bn(conv(y, w2), g2, b2)
    return jax.nn.relu(y + x)


if __name__ == "__main__":
    # Small shapes consistent with the module (residual add requires Cin == Cout).
    N, C, H, W = 2, 4, 16, 16

    key = jax.random.PRNGKey(0)
    kx, kw1, kw2, kg1, kb1 = jax.random.split(key, 5)

    x_nchw = jax.random.normal(kx, (N, C, H, W), dtype=jnp.float32)
    w1_oihw = jax.random.normal(kw1, (C, C, 3, 3), dtype=jnp.float32) * 0.1
    w2_oihw = jax.random.normal(kw2, (C, C, 3, 3), dtype=jnp.float32) * 0.1

    # BatchNorm affine params (PyTorch default init is gamma=1, beta=0; use
    # non-trivial values on BN1 to exercise the affine path).
    g1 = 1.0 + 0.1 * jax.random.normal(kg1, (C,), dtype=jnp.float32)
    b1 = 0.1 * jax.random.normal(kb1, (C,), dtype=jnp.float32)
    g2 = jnp.ones((C,), dtype=jnp.float32)
    b2 = jnp.zeros((C,), dtype=jnp.float32)

    out = jax.block_until_ready(resblock_nchw(x_nchw, w1_oihw, w2_oihw,
                                              g1, b1, g2, b2))
    ref = jax.block_until_ready(resblock_reference_nchw(x_nchw, w1_oihw, w2_oihw,
                                                        g1, b1, g2, b2))

    assert out.shape == (N, C, H, W)
    max_err = float(jnp.max(jnp.abs(out - ref)))
    assert jnp.allclose(out, ref, atol=2e-4, rtol=2e-4), max_err

    print("KERNEL_OK")
</pallas_src>

<mosaic_0001>
module attributes {stable_mosaic.version = 11 : i64} {
  func.func @resblock_kernel(%arg0: memref<2x8x128xf32, #tpu.memory_space<vmem>>, %arg1: memref<3x128x128xf32, #tpu.memory_space<vmem>>, %arg2: memref<3x128x128xf32, #tpu.memory_space<vmem>>, %arg3: memref<128x128xf32, #tpu.memory_space<vmem>>, %arg4: memref<1x128xf32, #tpu.memory_space<vmem>>, %arg5: memref<1x128xf32, #tpu.memory_space<vmem>>, %arg6: memref<1x128xf32, #tpu.memory_space<vmem>>, %arg7: memref<1x128xf32, #tpu.memory_space<vmem>>, %arg8: memref<16x128xf32, #tpu.memory_space<vmem>>) attributes {dimension_semantics = [], scalar_prefetch = 0 : i64, scratch_operands = 0 : i64, tpu.core_type = #tpu.core_type<tc>} {
    %c0 = arith.constant 0 : index
    %c0_0 = arith.constant 0 : index
    %c0_1 = arith.constant 0 : index
    %0 = vector.load %arg0[%c0, %c0_0, %c0_1] : memref<2x8x128xf32, #tpu.memory_space<vmem>>, vector<2x8x128xf32>
    %cst = arith.constant 0.000000e+00 : f32
    %1 = vector.broadcast %cst : f32 to vector<2x1x128xf32>
    %2 = tpu.concatenate %1, %0, %1 in 1 : vector<2x1x128xf32>, vector<2x8x128xf32>, vector<2x1x128xf32> -> vector<2x10x128xf32>
    %cst_2 = arith.constant 0.000000e+00 : f32
    %3 = vector.broadcast %cst_2 : f32 to vector<16x128xf32>
    %4 = vector.extract_strided_slice %2 {offsets = [0, 0, 0], sizes = [2, 8, 128], strides = [1, 1, 1]} : vector<2x10x128xf32> to vector<2x8x128xf32>
    %5 = vector.shape_cast %4 : vector<2x8x128xf32> to vector<16x128xf32>
    %c0_3 = arith.constant 0 : index
    %c0_4 = arith.constant 0 : index
    %c0_5 = arith.constant 0 : index
    %6 = vector.load %arg1[%c0_3, %c0_4, %c0_5] : memref<3x128x128xf32, #tpu.memory_space<vmem>>, vector<1x128x128xf32>
    %7 = vector.shape_cast %6 : vector<1x128x128xf32> to vector<128x128xf32>
    %cst_6 = arith.constant dense<0.000000e+00> : vector<16x128xf32>
    %8 = tpu.matmul %5, %7, %cst_6 {dimension_numbers = #tpu.dot_dimension_numbers<[1], [0], [0], [1], [0, 0, 1, 1], [], []>} : vector<16x128xf32>, vector<128x128xf32>, vector<16x128xf32> -> vector<16x128xf32>
    %9 = arith.addf %3, %8 : vector<16x128xf32>
    %10 = vector.extract_strided_slice %2 {offsets = [0, 1, 0], sizes = [2, 8, 128], strides = [1, 1, 1]} : vector<2x10x128xf32> to vector<2x8x128xf32>
    %11 = vector.shape_cast %10 : vector<2x8x128xf32> to vector<16x128xf32>
    %c1 = arith.constant 1 : index
    %c0_7 = arith.constant 0 : index
    %c0_8 = arith.constant 0 : index
    %12 = vector.load %arg1[%c1, %c0_7, %c0_8] : memref<3x128x128xf32, #tpu.memory_space<vmem>>, vector<1x128x128xf32>
    %13 = vector.shape_cast %12 : vector<1x128x128xf32> to vector<128x128xf32>
    %cst_9 = arith.constant dense<0.000000e+00> : vector<16x128xf32>
    %14 = tpu.matmul %11, %13, %cst_9 {dimension_numbers = #tpu.dot_dimension_numbers<[1], [0], [0], [1], [0, 0, 1, 1], [], []>} : vector<16x128xf32>, vector<128x128xf32>, vector<16x128xf32> -> vector<16x128xf32>
    %15 = arith.addf %9, %14 : vector<16x128xf32>
    %16 = vector.extract_strided_slice %2 {offsets = [0, 2, 0], sizes = [2, 8, 128], strides = [1, 1, 1]} : vector<2x10x128xf32> to vector<2x8x128xf32>
    %17 = vector.shape_cast %16 : vector<2x8x128xf32> to vector<16x128xf32>
    %c2 = arith.constant 2 : index
    %c0_10 = arith.constant 0 : index
    %c0_11 = arith.constant 0 : index
    %18 = vector.load %arg1[%c2, %c0_10, %c0_11] : memref<3x128x128xf32, #tpu.memory_space<vmem>>, vector<1x128x128xf32>
    %19 = vector.shape_cast %18 : vector<1x128x128xf32> to vector<128x128xf32>
    %cst_12 = arith.constant dense<0.000000e+00> : vector<16x128xf32>
    %20 = tpu.matmul %17, %19, %cst_12 {dimension_numbers = #tpu.dot_dimension_numbers<[1], [0], [0], [1], [0, 0, 1, 1], [], []>} : vector<16x128xf32>, vector<128x128xf32>, vector<16x128xf32> -> vector<16x128xf32>
    %21 = arith.addf %15, %20 : vector<16x128xf32>
    %cst_13 = arith.constant dense<0.000000e+00> : vector<128xf32>
    %22 = vector.multi_reduction <add>, %21, %cst_13 [0] : vector<16x128xf32> to vector<128xf32>
    %23 = vector.shape_cast %22 : vector<128xf32> to vector<1x128xf32>
    %24 = arith.mulf %21, %21 : vector<16x128xf32>
    %cst_14 = arith.constant dense<0.000000e+00> : vector<128xf32>
    %25 = vector.multi_reduction <add>, %24, %cst_14 [0] : vector<16x128xf32> to vector<128xf32>
    %26 = vector.shape_cast %25 : vector<128xf32> to vector<1x128xf32>
    %27 = tpu.concatenate %23, %26 in 0 : vector<1x128xf32>, vector<1x128xf32> -> vector<2x128xf32>
    %c0_15 = arith.constant 0 : index
    %c0_16 = arith.constant 0 : index
    %28 = vector.load %arg3[%c0_15, %c0_16] : memref<128x128xf32, #tpu.memory_space<vmem>>, vector<128x128xf32>
    %cst_17 = arith.constant dense<0.000000e+00> : vector<2x128xf32>
    %29 = tpu.matmul %27, %28, %cst_17 {dimension_numbers = #tpu.dot_dimension_numbers<[1], [0], [0], [1], [0, 0, 1, 1], [], []>} : vector<2x128xf32>, vector<128x128xf32>, vector<2x128xf32> -> vector<2x128xf32>
    %30 = vector.extract_strided_slice %29 {offsets = [0, 0], sizes = [1, 128], strides = [1, 1]} : vector<2x128xf32> to vector<1x128xf32>
    %31 = vector.extract_strided_slice %29 {offsets = [1, 0], sizes = [1, 128], strides = [1, 1]} : vector<2x128xf32> to vector<1x128xf32>
    %32 = arith.mulf %30, %30 : vector<1x128xf32>
    %33 = arith.subf %31, %32 : vector<1x128xf32>
    %cst_18 = arith.constant 0.000000e+00 : f32
    %34 = vector.broadcast %cst_18 : f32 to vector<1x128xf32>
    %35 = arith.maximumf %33, %34 : vector<1x128xf32>
    %c0_19 = arith.constant 0 : index
    %c0_20 = arith.constant 0 : index
    %36 = vector.load %arg4[%c0_19, %c0_20] : memref<1x128xf32, #tpu.memory_space<vmem>>, vector<1x128xf32>
    %cst_21 = arith.constant 9.99999974E-6 : f32
    %37 = vector.broadcast %cst_21 : f32 to vector<1x128xf32>
    %38 = arith.addf %35, %37 : vector<1x128xf32>
    %39 = math.rsqrt %38 : vector<1x128xf32>
    %40 = arith.mulf %36, %39 : vector<1x128xf32>
    %c0_22 = arith.constant 0 : index
    %c0_23 = arith.constant 0 : index
    %41 = vector.load %arg5[%c0_22, %c0_23] : memref<1x128xf32, #tpu.memory_space<vmem>>, vector<1x128xf32>
    %42 = arith.mulf %30, %40 : vector<1x128xf32>
    %43 = arith.subf %41, %42 : vector<1x128xf32>
    %44 = vector.broadcast %40 : vector<1x128xf32> to vector<16x128xf32>
    %45 = arith.mulf %21, %44 : vector<16x128xf32>
    %46 = vector.broadcast %43 : vector<1x128xf32> to vector<16x128xf32>
    %47 = arith.addf %45, %46 : vector<16x128xf32>
    %cst_24 = arith.constant 0.000000e+00 : f32
    %48 = vector.broadcast %cst_24 : f32 to vector<16x128xf32>
    %49 = arith.maximumf %47, %48 : vector<16x128xf32>
    %50 = vector.shape_cast %49 : vector<16x128xf32> to vector<2x8x128xf32>
    %51 = tpu.concatenate %1, %50, %1 in 1 : vector<2x1x128xf32>, vector<2x8x128xf32>, vector<2x1x128xf32> -> vector<2x10x128xf32>
    %cst_25 = arith.constant 0.000000e+00 : f32
    %52 = vector.broadcast %cst_25 : f32 to vector<16x128xf32>
    %53 = vector.extract_strided_slice %51 {offsets = [0, 0, 0], sizes = [2, 8, 128], strides = [1, 1, 1]} : vector<2x10x128xf32> to vector<2x8x128xf32>
    %54 = vector.shape_cast %53 : vector<2x8x128xf32> to vector<16x128xf32>
    %c0_26 = arith.constant 0 : index
    %c0_27 = arith.constant 0 : index
    %c0_28 = arith.constant 0 : index
    %55 = vector.load %arg2[%c0_26, %c0_27, %c0_28] : memref<3x128x128xf32, #tpu.memory_space<vmem>>, vector<1x128x128xf32>
    %56 = vector.shape_cast %55 : vector<1x128x128xf32> to vector<128x128xf32>
    %cst_29 = arith.constant dense<0.000000e+00> : vector<16x128xf32>
    %57 = tpu.matmul %54, %56, %cst_29 {dimension_numbers = #tpu.dot_dimension_numbers<[1], [0], [0], [1], [0, 0, 1, 1], [], []>} : vector<16x128xf32>, vector<128x128xf32>, vector<16x128xf32> -> vector<16x128xf32>
    %58 = arith.addf %52, %57 : vector<16x128xf32>
    %59 = vector.extract_strided_slice %51 {offsets = [0, 1, 0], sizes = [2, 8, 128], strides = [1, 1, 1]} : vector<2x10x128xf32> to vector<2x8x128xf32>
    %60 = vector.shape_cast %59 : vector<2x8x128xf32> to vector<16x128xf32>
    %c1_30 = arith.constant 1 : index
    %c0_31 = arith.constant 0 : index
    %c0_32 = arith.constant 0 : index
    %61 = vector.load %arg2[%c1_30, %c0_31, %c0_32] : memref<3x128x128xf32, #tpu.memory_space<vmem>>, vector<1x128x128xf32>
    %62 = vector.shape_cast %61 : vector<1x128x128xf32> to vector<128x128xf32>
    %cst_33 = arith.constant dense<0.000000e+00> : vector<16x128xf32>
    %63 = tpu.matmul %60, %62, %cst_33 {dimension_numbers = #tpu.dot_dimension_numbers<[1], [0], [0], [1], [0, 0, 1, 1], [], []>} : vector<16x128xf32>, vector<128x128xf32>, vector<16x128xf32> -> vector<16x128xf32>
    %64 = arith.addf %58, %63 : vector<16x128xf32>
    %65 = vector.extract_strided_slice %51 {offsets = [0, 2, 0], sizes = [2, 8, 128], strides = [1, 1, 1]} : vector<2x10x128xf32> to vector<2x8x128xf32>
    %66 = vector.shape_cast %65 : vector<2x8x128xf32> to vector<16x128xf32>
    %c2_34 = arith.constant 2 : index
    %c0_35 = arith.constant 0 : index
    %c0_36 = arith.constant 0 : index
    %67 = vector.load %arg2[%c2_34, %c0_35, %c0_36] : memref<3x128x128xf32, #tpu.memory_space<vmem>>, vector<1x128x128xf32>
    %68 = vector.shape_cast %67 : vector<1x128x128xf32> to vector<128x128xf32>
    %cst_37 = arith.constant dense<0.000000e+00> : vector<16x128xf32>
    %69 = tpu.matmul %66, %68, %cst_37 {dimension_numbers = #tpu.dot_dimension_numbers<[1], [0], [0], [1], [0, 0, 1, 1], [], []>} : vector<16x128xf32>, vector<128x128xf32>, vector<16x128xf32> -> vector<16x128xf32>
    %70 = arith.addf %64, %69 : vector<16x128xf32>
    %cst_38 = arith.constant dense<0.000000e+00> : vector<128xf32>
    %71 = vector.multi_reduction <add>, %70, %cst_38 [0] : vector<16x128xf32> to vector<128xf32>
    %72 = vector.shape_cast %71 : vector<128xf32> to vector<1x128xf32>
    %73 = arith.mulf %70, %70 : vector<16x128xf32>
    %cst_39 = arith.constant dense<0.000000e+00> : vector<128xf32>
    %74 = vector.multi_reduction <add>, %73, %cst_39 [0] : vector<16x128xf32> to vector<128xf32>
    %75 = vector.shape_cast %74 : vector<128xf32> to vector<1x128xf32>
    %76 = tpu.concatenate %72, %75 in 0 : vector<1x128xf32>, vector<1x128xf32> -> vector<2x128xf32>
    %c0_40 = arith.constant 0 : index
    %c0_41 = arith.constant 0 : index
    %77 = vector.load %arg3[%c0_40, %c0_41] : memref<128x128xf32, #tpu.memory_space<vmem>>, vector<128x128xf32>
    %cst_42 = arith.constant dense<0.000000e+00> : vector<2x128xf32>
    %78 = tpu.matmul %76, %77, %cst_42 {dimension_numbers = #tpu.dot_dimension_numbers<[1], [0], [0], [1], [0, 0, 1, 1], [], []>} : vector<2x128xf32>, vector<128x128xf32>, vector<2x128xf32> -> vector<2x128xf32>
    %79 = vector.extract_strided_slice %78 {offsets = [0, 0], sizes = [1, 128], strides = [1, 1]} : vector<2x128xf32> to vector<1x128xf32>
    %80 = vector.extract_strided_slice %78 {offsets = [1, 0], sizes = [1, 128], strides = [1, 1]} : vector<2x128xf32> to vector<1x128xf32>
    %81 = arith.mulf %79, %79 : vector<1x128xf32>
    %82 = arith.subf %80, %81 : vector<1x128xf32>
    %cst_43 = arith.constant 0.000000e+00 : f32
    %83 = vector.broadcast %cst_43 : f32 to vector<1x128xf32>
    %84 = arith.maximumf %82, %83 : vector<1x128xf32>
    %c0_44 = arith.constant 0 : index
    %c0_45 = arith.constant 0 : index
    %85 = vector.load %arg6[%c0_44, %c0_45] : memref<1x128xf32, #tpu.memory_space<vmem>>, vector<1x128xf32>
    %cst_46 = arith.constant 9.99999974E-6 : f32
    %86 = vector.broadcast %cst_46 : f32 to vector<1x128xf32>
    %87 = arith.addf %84, %86 : vector<1x128xf32>
    %88 = math.rsqrt %87 : vector<1x128xf32>
    %89 = arith.mulf %85, %88 : vector<1x128xf32>
    %c0_47 = arith.constant 0 : index
    %c0_48 = arith.constant 0 : index
    %90 = vector.load %arg7[%c0_47, %c0_48] : memref<1x128xf32, #tpu.memory_space<vmem>>, vector<1x128xf32>
    %91 = arith.mulf %79, %89 : vector<1x128xf32>
    %92 = arith.subf %90, %91 : vector<1x128xf32>
    %93 = vector.broadcast %89 : vector<1x128xf32> to vector<16x128xf32>
    %94 = arith.mulf %70, %93 : vector<16x128xf32>
    %95 = vector.broadcast %92 : vector<1x128xf32> to vector<16x128xf32>
    %96 = arith.addf %94, %95 : vector<16x128xf32>
    %97 = vector.shape_cast %0 : vector<2x8x128xf32> to vector<16x128xf32>
    %98 = arith.addf %96, %97 : vector<16x128xf32>
    %cst_49 = arith.constant 0.000000e+00 : f32
    %99 = vector.broadcast %cst_49 : f32 to vector<16x128xf32>
    %100 = arith.maximumf %98, %99 : vector<16x128xf32>
    %c0_50 = arith.constant 0 : index
    %c0_51 = arith.constant 0 : index
    %101 = vector.load %arg8[%c0_50, %c0_51] : memref<16x128xf32, #tpu.memory_space<vmem>>, vector<16x128xf32>
    tpu.vector_store %arg8[%c0_50, %c0_51], %100 {strides = array<i32>} : memref<16x128xf32, #tpu.memory_space<vmem>>, vector<16x128xf32>,
    return
  }
}

</mosaic_0001>

<llo_original>
// kernel: tile.24
$region0: #{tile.24}
  %s0 = inlined_call_operand.vmem [shape: f32[32,4], index: 0, kind: input, shape index: {}]
  %s1 = inlined_call_operand.vmem [shape: f32[1,128], index: 1, kind: output, shape index: {}]
  $region1: #{tile.24} parent=0
    #allocation0 [shape = 'u8[4096]{0}', space=vmem, size = 0x1000, scoped, tag = 'scoped mem for output reshape']
    %v2 = vld [vmem:[%s0] sm:$0x1]
    %vm3 = vcmask 31744
    %4 = vst.msk [vmem:[#allocation0] sm:$0x1] %vm3, %v2
    %s5 = scalar_lea.vmem %s0, 31
    %v6 = vld [vmem:[%s5] sm:$0x1]
    %7 = vrot.lane.b32.xlu0 %v6, 124
    %v8 = vpop.permute.xlu0 %7
    %vm9 = vcmask 1048544
    %10 = vst.msk [vmem:[#allocation0] sm:$0x1] %vm9, %v8
    %s11 = scalar_lea.vmem %s0, 30
    %v12 = vld [vmem:[%s11] sm:$0x1]
    %13 = vrot.lane.b32.xlu0 %v12, 120
    %v14 = vpop.permute.xlu0 %13
    %vm15 = vcmask 1015744
    %16 = vst.msk [vmem:[#allocation0] sm:$0x1] %vm15, %v14
    %s17 = scalar_lea.vmem %s0, 29
    %v18 = vld [vmem:[%s17] sm:$0x1]
    %19 = vrot.lane.b32.xlu0 %v18, 116
    %v20 = vpop.permute.xlu0 %19
    %vm21 = vcmask 982944
    %22 = vst.msk [vmem:[#allocation0] sm:$0x1] %vm21, %v20
    %s23 = scalar_lea.vmem %s0, 28
    %v24 = vld [vmem:[%s23] sm:$0x1]
    %25 = vrot.lane.b32.xlu0 %v24, 112
    %v26 = vpop.permute.xlu0 %25
    %vm27 = vcmask 950144
    %28 = vst.msk [vmem:[#allocation0] sm:$0x1] %vm27, %v26
    %s29 = scalar_lea.vmem %s0, 27
    %v30 = vld [vmem:[%s29] sm:$0x1]
    %31 = vrot.lane.b32.xlu0 %v30, 108
    %v32 = vpop.permute.xlu0 %31
    %vm33 = vcmask 917344
    %34 = vst.msk [vmem:[#allocation0] sm:$0x1] %vm33, %v32
    %s35 = scalar_lea.vmem %s0, 26
    %v36 = vld [vmem:[%s35] sm:$0x1]
    %37 = vrot.lane.b32.xlu0 %v36, 104
    %v38 = vpop.permute.xlu0 %37
    %vm39 = vcmask 884544
    %40 = vst.msk [vmem:[#allocation0] sm:$0x1] %vm39, %v38
    %s41 = scalar_lea.vmem %s0, 25
    %v42 = vld [vmem:[%s41] sm:$0x1]
    %43 = vrot.lane.b32.xlu0 %v42, 100
    %v44 = vpop.permute.xlu0 %43
    %vm45 = vcmask 851744
    %46 = vst.msk [vmem:[#allocation0] sm:$0x1] %vm45, %v44
    %s47 = scalar_lea.vmem %s0, 24
    %v48 = vld [vmem:[%s47] sm:$0x1]
    %49 = vrot.lane.b32.xlu0 %v48, 96
    %v50 = vpop.permute.xlu0 %49
    %vm51 = vcmask 818944
    %52 = vst.msk [vmem:[#allocation0] sm:$0x1] %vm51, %v50
    %s53 = scalar_lea.vmem %s0, 23
    %v54 = vld [vmem:[%s53] sm:$0x1]
    %55 = vrot.lane.b32.xlu0 %v54, 92
    %v56 = vpop.permute.xlu0 %55
    %vm57 = vcmask 786144
    %58 = vst.msk [vmem:[#allocation0] sm:$0x1] %vm57, %v56
    %s59 = scalar_lea.vmem %s0, 22
    %v60 = vld [vmem:[%s59] sm:$0x1]
    %61 = vrot.lane.b32.xlu0 %v60, 88
    %v62 = vpop.permute.xlu0 %61
    %vm63 = vcmask 753344
    %64 = vst.msk [vmem:[#allocation0] sm:$0x1] %vm63, %v62
    %s65 = scalar_lea.vmem %s0, 21
    %v66 = vld [vmem:[%s65] sm:$0x1]
    %67 = vrot.lane.b32.xlu0 %v66, 84
    %v68 = vpop.permute.xlu0 %67
    %vm69 = vcmask 720544
    %70 = vst.msk [vmem:[#allocation0] sm:$0x1] %vm69, %v68
    %s71 = scalar_lea.vmem %s0, 20
    %v72 = vld [vmem:[%s71] sm:$0x1]
    %73 = vrot.lane.b32.xlu0 %v72, 80
    %v74 = vpop.permute.xlu0 %73
    %vm75 = vcmask 687744
    %76 = vst.msk [vmem:[#allocation0] sm:$0x1] %vm75, %v74
    %s77 = scalar_lea.vmem %s0, 19
    %v78 = vld [vmem:[%s77] sm:$0x1]
    %79 = vrot.lane.b32.xlu0 %v78, 76
    %v80 = vpop.permute.xlu0 %79
    %vm81 = vcmask 654944
    %82 = vst.msk [vmem:[#allocation0] sm:$0x1] %vm81, %v80
    %s83 = scalar_lea.vmem %s0, 18
    %v84 = vld [vmem:[%s83] sm:$0x1]
    %85 = vrot.lane.b32.xlu0 %v84, 72
    %v86 = vpop.permute.xlu0 %85
    %vm87 = vcmask 622144
    %88 = vst.msk [vmem:[#allocation0] sm:$0x1] %vm87, %v86
    %s89 = scalar_lea.vmem %s0, 17
    %v90 = vld [vmem:[%s89] sm:$0x1]
    %91 = vrot.lane.b32.xlu0 %v90, 68
    %v92 = vpop.permute.xlu0 %91
    %vm93 = vcmask 589344
    %94 = vst.msk [vmem:[#allocation0] sm:$0x1] %vm93, %v92
    %s95 = scalar_lea.vmem %s0, 16
    %v96 = vld [vmem:[%s95] sm:$0x1]
    %97 = vrot.lane.b32.xlu0 %v96, 64
    %v98 = vpop.permute.xlu0 %97
    %vm99 = vcmask 556544
    %100 = vst.msk [vmem:[#allocation0] sm:$0x1] %vm99, %v98
    %s101 = scalar_lea.vmem %s0, 15
    %v102 = vld [vmem:[%s101] sm:$0x1]
    %103 = vrot.lane.b32.xlu0 %v102, 60
    %v104 = vpop.permute.xlu0 %103
    %vm105 = vcmask 523744
    %106 = vst.msk [vmem:[#allocation0] sm:$0x1] %vm105, %v104
    %s107 = scalar_lea.vmem %s0, 14
    %v108 = vld [vmem:[%s107] sm:$0x1]
    %109 = vrot.lane.b32.xlu0 %v108, 56
    %v110 = vpop.permute.xlu0 %109
    %vm111 = vcmask 490944
    %112 = vst.msk [vmem:[#allocation0] sm:$0x1] %vm111, %v110
    %s113 = scalar_lea.vmem %s0, 13
    %v114 = vld [vmem:[%s113] sm:$0x1]
    %115 = vrot.lane.b32.xlu0 %v114, 52
    %v116 = vpop.permute.xlu0 %115
    %vm117 = vcmask 458144
    %118 = vst.msk [vmem:[#allocation0] sm:$0x1] %vm117, %v116
    %s119 = scalar_lea.vmem %s0, 12
    %v120 = vld [vmem:[%s119] sm:$0x1]
    %121 = vrot.lane.b32.xlu0 %v120, 48
    %v122 = vpop.permute.xlu0 %121
    %vm123 = vcmask 425344
    %124 = vst.msk [vmem:[#allocation0] sm:$0x1] %vm123, %v122
    %s125 = scalar_lea.vmem %s0, 11
    %v126 = vld [vmem:[%s125] sm:$0x1]
    %127 = vrot.lane.b32.xlu0 %v126, 44
    %v128 = vpop.permute.xlu0 %127
    %vm129 = vcmask 392544
    %130 = vst.msk [vmem:[#allocation0] sm:$0x1] %vm129, %v128
    %s131 = scalar_lea.vmem %s0, 10
    %v132 = vld [vmem:[%s131] sm:$0x1]
    %133 = vrot.lane.b32.xlu0 %v132, 40
    %v134 = vpop.permute.xlu0 %133
    %vm135 = vcmask 359744
    %136 = vst.msk [vmem:[#allocation0] sm:$0x1] %vm135, %v134
    %s137 = scalar_lea.vmem %s0, 9
    %v138 = vld [vmem:[%s137] sm:$0x1]
    %139 = vrot.lane.b32.xlu0 %v138, 36
    %v140 = vpop.permute.xlu0 %139
    %vm141 = vcmask 326944
    %142 = vst.msk [vmem:[#allocation0] sm:$0x1] %vm141, %v140
    %s143 = scalar_lea.vmem %s0, 8
    %v144 = vld [vmem:[%s143] sm:$0x1]
    %145 = vrot.lane.b32.xlu0 %v144, 32
    %v146 = vpop.permute.xlu0 %145
    %vm147 = vcmask 294144
    %148 = vst.msk [vmem:[#allocation0] sm:$0x1] %vm147, %v146
    %s149 = scalar_lea.vmem %s0, 7
    %v150 = vld [vmem:[%s149] sm:$0x1]
    %151 = vrot.lane.b32.xlu0 %v150, 28
    %v152 = vpop.permute.xlu0 %151
    %vm153 = vcmask 261344
    %154 = vst.msk [vmem:[#allocation0] sm:$0x1] %vm153, %v152
    %s155 = scalar_lea.vmem %s0, 6
    %v156 = vld [vmem:[%s155] sm:$0x1]
    %157 = vrot.lane.b32.xlu0 %v156, 24
    %v158 = vpop.permute.xlu0 %157
    %vm159 = vcmask 228544
    %160 = vst.msk [vmem:[#allocation0] sm:$0x1] %vm159, %v158
    %s161 = scalar_lea.vmem %s0, 5
    %v162 = vld [vmem:[%s161] sm:$0x1]
    %163 = vrot.lane.b32.xlu0 %v162, 20
    %v164 = vpop.permute.xlu0 %163
    %vm165 = vcmask 195744
    %166 = vst.msk [vmem:[#allocation0] sm:$0x1] %vm165, %v164
    %s167 = scalar_lea.vmem %s0, 4
    %v168 = vld [vmem:[%s167] sm:$0x1]
    %169 = vrot.lane.b32.xlu0 %v168, 16
    %v170 = vpop.permute.xlu0 %169
    %vm171 = vcmask 162944
    %172 = vst.msk [vmem:[#allocation0] sm:$0x1] %vm171, %v170
    %s173 = scalar_lea.vmem %s0, 3
    %v174 = vld [vmem:[%s173] sm:$0x1]
    %175 = vrot.lane.b32.xlu0 %v174, 12
    %v176 = vpop.permute.xlu0 %175
    %vm177 = vcmask 130144
    %178 = vst.msk [vmem:[#allocation0] sm:$0x1] %vm177, %v176
    %s179 = scalar_lea.vmem %s0, 2
    %v180 = vld [vmem:[%s179] sm:$0x1]
    %181 = vrot.lane.b32.xlu0 %v180, 8
    %v182 = vpop.permute.xlu0 %181
    %vm183 = vcmask 97344
    %184 = vst.msk [vmem:[#allocation0] sm:$0x1] %vm183, %v182
    %s185 = scalar_lea.vmem %s0, 1
    %v186 = vld [vmem:[%s185] sm:$0x1]
    %187 = vrot.lane.b32.xlu0 %v186, 4
    %v188 = vpop.permute.xlu0 %187
    %vm189 = vcmask 64544
    %190 = vst.msk [vmem:[#allocation0] sm:$0x1] %vm189, %v188
    %s192 = ssub.s32 2, 1
    %v193 = vld [vmem:[#allocation0] sm:%s192]
    %s195 = ssub.s32 2, 1
    %196 = vst [vmem:[%s1] sm:%s195] %v193

// kernel: tile.23
$region0: #{tile.23}
  #allocation2 [shape = 's32[1]{0}', space=sflag, size = 0x4, scoped, tag = 'scoped memory for tile.23']
  %s0 = inlined_call_operand.hbm [shape: f32[4], index: 0, kind: input, shape index: {}]
  %s1 = inlined_call_operand.vmem [shape: f32[32,4], index: 1, kind: output, shape index: {}]
  $region1: #{tile.23} parent=0
    #allocation0 [shape = 'u8[512]{0}', space=vmem, size = 0x400, scoped, tag = 'operand span for operand 0']
    #allocation1 [shape = 's32[1]{0}', space=sflag, size = 0x4, scoped, tag = 'scoped memory for tile.23']
    %2 = vsyncpa [#allocation1], 0
    // Predicated region
    $region2: #{tile.23} parent=1 // pred_check
      _
    $region3: #{tile.23} parent=1 // pred_check_branch
      %4 = sbr.rel (0) target = $region5
    $region4: #{tile.23} parent=1 // pred_region
      %6 = vsyncadd [#allocation1], 0
      %s8 = sshll.u32 %s0, 4
      %s9 = int_to_ptr.hbm [resolvable:$true] %s8
      %s10 = sshll.u32 [#allocation0], 4
      %s11 = int_to_ptr.vmem [resolvable:$true] %s10
      %13 = dma.hbm_to_vmem [thread:$0]  %s9, 16, %s11, [#allocation1]
    $region5: #{tile.23} parent=1 // pred_fallthru
      _
    // Predicated region
    $region6: #{tile.23} parent=1 // pred_check
      _
    $region7: #{tile.23} parent=1 // pred_check_branch
      %15 = sbr.rel (0) target = $region9
    $region8: #{tile.23} parent=1 // pred_region
      %17 = dma.done [#allocation1], 16
    $region9: #{tile.23} parent=1 // pred_fallthru
      _
    %v18 = vld [vmem:[#allocation0] ss:$0 sm:$0xff]
    %19 = vst [vmem:[%s1] sm:$0xff] %v18
    %s20 = scalar_lea.vmem %s1, 8
    %21 = vst [vmem:[%s20] sm:$0xff] %v18
    %s22 = scalar_lea.vmem %s1, 16
    %23 = vst [vmem:[%s22] sm:$0xff] %v18
    %s24 = scalar_lea.vmem %s1, 24
    %25 = vst [vmem:[%s24] sm:$0xff] %v18
    %26 = vsyncpa [#allocation1], 1

// kernel: resblock_nchw.1
$region0: #{resblock_nchw.1}
  #allocation0 [shape = 'u32[]', space=smem, size = 0x4, offset = 0x4, fixed_abs, tag = 'smem constant byte address 0x4 - core index']
  #allocation1 [shape = 'u32[72,128]{1,0:T(1,128)}', space=vmem, size = 0x9000, scoped, tag = 'internal scratch']
  %s0 = inlined_call_operand.vmem [shape: f32[2,8,128], index: 0, kind: input, shape index: {}]
  %s1 = inlined_call_operand.vmem [shape: f32[3,128,128], index: 1, kind: input, shape index: {}]
  %s2 = inlined_call_operand.vmem [shape: f32[3,128,128], index: 2, kind: input, shape index: {}]
  %s3 = inlined_call_operand.vmem [shape: f32[128,128], index: 3, kind: input, shape index: {}]
  %s4 = inlined_call_operand.vmem [shape: f32[1,128], index: 4, kind: input, shape index: {}]
  %s5 = inlined_call_operand.vmem [shape: f32[1,128], index: 5, kind: input, shape index: {}]
  %s6 = inlined_call_operand.vmem [shape: f32[1,128], index: 6, kind: input, shape index: {}]
  %s7 = inlined_call_operand.vmem [shape: f32[1,128], index: 7, kind: input, shape index: {}]
  %s8 = inlined_call_operand.vmem [shape: f32[16,128], index: 8, kind: output, shape index: {}]
  %s9 = sld [smem:[#allocation0]]
  $region42: #{resblock_nchw.1} parent=0
    _
  %s11 = ssub.s32 1, %s9
  %s12 = scalar_select 0, %s11, %s9
  // Predicated region
  $region2: #{resblock_nchw.1} parent=0 // pred_check
    _
  $region3: #{resblock_nchw.1} parent=0 // pred_check_branch
    %14 = sbr.rel (0) target = $region5
  $region4: #{resblock_nchw.1} parent=0 // pred_region
    _
  $region5: #{resblock_nchw.1} parent=0 // pred_fallthru
    _
  // Predicated region
  $region6: #{resblock_nchw.1} parent=0 // pred_check
    _
  $region7: #{resblock_nchw.1} parent=0 // pred_check_branch
    %16 = sbr.rel (0) target = $region9
  $region8: #{resblock_nchw.1} parent=0 // pred_region
    _
  $region9: #{resblock_nchw.1} parent=0 // pred_fallthru
    _
  // Predicated region
  $region10: #{resblock_nchw.1} parent=0 // pred_check
    _
  $region11: #{resblock_nchw.1} parent=0 // pred_check_branch
    %18 = sbr.rel (0) target = $region13
  $region12: #{resblock_nchw.1} parent=0 // pred_region
    _
  $region13: #{resblock_nchw.1} parent=0 // pred_fallthru
    _
  // Predicated region
  $region14: #{resblock_nchw.1} parent=0 // pred_check
    _
  $region15: #{resblock_nchw.1} parent=0 // pred_check_branch
    %20 = sbr.rel (0) target = $region17
  $region16: #{resblock_nchw.1} parent=0 // pred_region
    _
  $region17: #{resblock_nchw.1} parent=0 // pred_fallthru
    _
  // Predicated region
  $region18: #{resblock_nchw.1} parent=0 // pred_check
    _
  $region19: #{resblock_nchw.1} parent=0 // pred_check_branch
    %22 = sbr.rel (0) target = $region21
  $region20: #{resblock_nchw.1} parent=0 // pred_region
    _
  $region21: #{resblock_nchw.1} parent=0 // pred_fallthru
    _
  // Predicated region
  $region22: #{resblock_nchw.1} parent=0 // pred_check
    _
  $region23: #{resblock_nchw.1} parent=0 // pred_check_branch
    %24 = sbr.rel (0) target = $region25
  $region24: #{resblock_nchw.1} parent=0 // pred_region
    _
  $region25: #{resblock_nchw.1} parent=0 // pred_fallthru
    _
  // Predicated region
  $region26: #{resblock_nchw.1} parent=0 // pred_check
    _
  $region27: #{resblock_nchw.1} parent=0 // pred_check_branch
    %26 = sbr.rel (0) target = $region29
  $region28: #{resblock_nchw.1} parent=0 // pred_region
    _
  $region29: #{resblock_nchw.1} parent=0 // pred_fallthru
    _
  // Predicated region
  $region30: #{resblock_nchw.1} parent=0 // pred_check
    _
  $region31: #{resblock_nchw.1} parent=0 // pred_check_branch
    %28 = sbr.rel (0) target = $region33
  $region32: #{resblock_nchw.1} parent=0 // pred_region
    _
  $region33: #{resblock_nchw.1} parent=0 // pred_fallthru
    _
  %v29 = vld [vmem:[%s0] sm:$0xff]
  %v30 = vld [vmem:[%s0 + $0x8] sm:$0xff]
  %v33 = vrot.slane %v29, 7
  %v34 = vrot.slane %v30, 7
  %vm37 = vcmask 1040384
  %v38 = vsel %vm37, 0.0, %v33
  %v39 = vsel %vm37, 0.0, %v34
  %v40 = vsel %vm37, %v33, 0.0
  %v41 = vsel %vm37, %v34, 0.0
  %v42 = vld [vmem:[%s1] sm:$0xff]
  %v43 = vld [vmem:[%s1 + $0x8] sm:$0xff]
  %v44 = vld [vmem:[%s1 + $0x10] sm:$0xff]
  %v45 = vld [vmem:[%s1 + $0x18] sm:$0xff]
  %v46 = vld [vmem:[%s1 + $0x20] sm:$0xff]
  %v47 = vld [vmem:[%s1 + $0x28] sm:$0xff]
  %v48 = vld [vmem:[%s1 + $0x30] sm:$0xff]
  %v49 = vld [vmem:[%s1 + $0x38] sm:$0xff]
  %v50 = vld [vmem:[%s1 + $0x40] sm:$0xff]
  %v51 = vld [vmem:[%s1 + $0x48] sm:$0xff]
  %v52 = vld [vmem:[%s1 + $0x50] sm:$0xff]
  %v53 = vld [vmem:[%s1 + $0x58] sm:$0xff]
  %v54 = vld [vmem:[%s1 + $0x60] sm:$0xff]
  %v55 = vld [vmem:[%s1 + $0x68] sm:$0xff]
  %v56 = vld [vmem:[%s1 + $0x70] sm:$0xff]
  %v57 = vld [vmem:[%s1 + $0x78] sm:$0xff]
  %vm62 = vcmask 1046528
  %v63 = vrot.slane %v38, 1
  %v64 = vrot.slane %v40, 1
  %v65 = vsel %vm62, %v63, %v64
  %v66 = vrot.slane %v39, 1
  %v67 = vrot.slane %v41, 1
  %v68 = vsel %vm62, %v66, %v67
  %s71 = scalar_lea.vmem %s1, 128
  %v72 = vld [vmem:[%s71] sm:$0xff]
  %v73 = vld [vmem:[%s71 + $0x8] sm:$0xff]
  %v74 = vld [vmem:[%s71 + $0x10] sm:$0xff]
  %v75 = vld [vmem:[%s71 + $0x18] sm:$0xff]
  %v76 = vld [vmem:[%s71 + $0x20] sm:$0xff]
  %v77 = vld [vmem:[%s71 + $0x28] sm:$0xff]
  %v78 = vld [vmem:[%s71 + $0x30] sm:$0xff]
  %v79 = vld [vmem:[%s71 + $0x38] sm:$0xff]
  %v80 = vld [vmem:[%s71 + $0x40] sm:$0xff]
  %v81 = vld [vmem:[%s71 + $0x48] sm:$0xff]
  %v82 = vld [vmem:[%s71 + $0x50] sm:$0xff]
  %v83 = vld [vmem:[%s71 + $0x58] sm:$0xff]
  %v84 = vld [vmem:[%s71 + $0x60] sm:$0xff]
  %v85 = vld [vmem:[%s71 + $0x68] sm:$0xff]
  %v86 = vld [vmem:[%s71 + $0x70] sm:$0xff]
  %v87 = vld [vmem:[%s71 + $0x78] sm:$0xff]
  %88 = vmatpush.msra.mxu0 %v87
  %89 = vmatpush.msra.mxu0 %v86
  %90 = vmatpush.msra.mxu0 %v85
  %91 = vmatpush.msra.mxu0 %v84
  %92 = vmatpush.msra.mxu0 %v83
  %93 = vmatpush.msra.mxu0 %v82
  %94 = vmatpush.msra.mxu0 %v81
  %95 = vmatpush.msra.mxu0 %v80
  %96 = vmatpush.msra.mxu0 %v79
  %97 = vmatpush.msra.mxu0 %v78
  %98 = vmatpush.msra.mxu0 %v77
  %99 = vmatpush.msra.mxu0 %v76
  %100 = vmatpush.msra.mxu0 %v75
  %101 = vmatpush.msra.mxu0 %v74
  %102 = vmatpush.msra.mxu0 %v73
  %103 = vmatpush.msra.mxu0 %v72
  %104 = vmatmul.f32.gmra.mxu0 %v65
  %v105 = vpop.f32.mrf.mxu0
  %v106 = vadd.f32 0.0, %v105
  %107 = vmatmul.f32.gmra.mxu0 %v68
  %v108 = vpop.f32.mrf.mxu0
  %v109 = vadd.f32 0.0, %v108
  %110 = vdwg.mxu0
  %111 = vmatpush.msra.mxu0 %v57
  %112 = vmatpush.msra.mxu0 %v56
  %113 = vmatpush.msra.mxu0 %v55
  %114 = vmatpush.msra.mxu0 %v54
  %115 = vmatpush.msra.mxu0 %v53
  %116 = vmatpush.msra.mxu0 %v52
  %117 = vmatpush.msra.mxu0 %v51
  %118 = vmatpush.msra.mxu0 %v50
  %119 = vmatpush.msra.mxu0 %v49
  %120 = vmatpush.msra.mxu0 %v48
  %121 = vmatpush.msra.mxu0 %v47
  %122 = vmatpush.msra.mxu0 %v46
  %123 = vmatpush.msra.mxu0 %v45
  %124 = vmatpush.msra.mxu0 %v44
  %125 = vmatpush.msra.mxu0 %v43
  %126 = vmatpush.msra.mxu0 %v42
  %127 = vmatmul.f32.gmra.mxu0 %v38
  %v128 = vpop.f32.mrf.mxu0
  %v129 = vadd.f32 %v106, %v128
  %130 = vmatmul.f32.gmra.mxu0 %v39
  %v131 = vpop.f32.mrf.mxu0
  %v132 = vadd.f32 %v109, %v131
  %133 = vdwg.mxu0
  %vm134 = vcmask 1045504
  %v135 = vrot.slane %v38, 2
  %v136 = vrot.slane %v40, 2
  %v137 = vsel %vm134, %v135, %v136
  %v138 = vrot.slane %v39, 2
  %v139 = vrot.slane %v41, 2
  %v140 = vsel %vm134, %v138, %v139
  %s143 = scalar_lea.vmem %s1, 256
  %v144 = vld [vmem:[%s143] sm:$0xff]
  %v145 = vld [vmem:[%s143 + $0x8] sm:$0xff]
  %v146 = vld [vmem:[%s143 + $0x10] sm:$0xff]
  %v147 = vld [vmem:[%s143 + $0x18] sm:$0xff]
  %v148 = vld [vmem:[%s143 + $0x20] sm:$0xff]
  %v149 = vld [vmem:[%s143 + $0x28] sm:$0xff]
  %v150 = vld [vmem:[%s143 + $0x30] sm:$0xff]
  %v151 = vld [vmem:[%s143 + $0x38] sm:$0xff]
  %v152 = vld [vmem:[%s143 + $0x40] sm:$0xff]
  %v153 = vld [vmem:[%s143 + $0x48] sm:$0xff]
  %v154 = vld [vmem:[%s143 + $0x50] sm:$0xff]
  %v155 = vld [vmem:[%s143 + $0x58] sm:$0xff]
  %v156 = vld [vmem:[%s143 + $0x60] sm:$0xff]
  %v157 = vld [vmem:[%s143 + $0x68] sm:$0xff]
  %v158 = vld [vmem:[%s143 + $0x70] sm:$0xff]
  %v159 = vld [vmem:[%s143 + $0x78] sm:$0xff]
  %160 = vmatpush.msra.mxu0 %v159
  %161 = vmatpush.msra.mxu0 %v158
  %162 = vmatpush.msra.mxu0 %v157
  %163 = vmatpush.msra.mxu0 %v156
  %164 = vmatpush.msra.mxu0 %v155
  %165 = vmatpush.msra.mxu0 %v154
  %166 = vmatpush.msra.mxu0 %v153
  %167 = vmatpush.msra.mxu0 %v152
  %168 = vmatpush.msra.mxu0 %v151
  %169 = vmatpush.msra.mxu0 %v150
  %170 = vmatpush.msra.mxu0 %v149
  %171 = vmatpush.msra.mxu0 %v148
  %172 = vmatpush.msra.mxu0 %v147
  %173 = vmatpush.msra.mxu0 %v146
  %174 = vmatpush.msra.mxu0 %v145
  %175 = vmatpush.msra.mxu0 %v144
  %176 = vmatmul.f32.gmra.mxu0 %v137
  %v177 = vpop.f32.mrf.mxu0
  %v178 = vadd.f32 0.0, %v177
  %179 = vmatmul.f32.gmra.mxu0 %v140
  %v180 = vpop.f32.mrf.mxu0
  %v181 = vadd.f32 0.0, %v180
  %182 = vdwg.mxu0
  %v183 = vadd.f32 %v129, %v178
  %v184 = vadd.f32 %v132, %v181
  %v185 = vadd.f32 %v183, %v184
  %v186 = vrot.slane %v185, 4
  %v187 = vadd.f32 %v185, %v186
  %v188 = vrot.slane %v187, 2
  %v189 = vadd.f32 %v187, %v188
  %v190 = vrot.slane %v189, 1
  %v191 = vadd.f32 %v189, %v190
  %v192 = vmul.f32 %v183, %v183
  %v193 = vmul.f32 %v184, %v184
  %v194 = vadd.f32 %v192, %v193
  %v195 = vrot.slane %v194, 4
  %v196 = vadd.f32 %v194, %v195
  %v197 = vrot.slane %v196, 2
  %v198 = vadd.f32 %v196, %v197
  %v199 = vrot.slane %v198, 1
  %v200 = vadd.f32 %v198, %v199
  %v201 = vsel %vm37, %v191, %v200
  %v202 = vld [vmem:[%s3] sm:$0xff]
  %v203 = vld [vmem:[%s3 + $0x8] sm:$0xff]
  %v204 = vld [vmem:[%s3 + $0x10] sm:$0xff]
  %v205 = vld [vmem:[%s3 + $0x18] sm:$0xff]
  %v206 = vld [vmem:[%s3 + $0x20] sm:$0xff]
  %v207 = vld [vmem:[%s3 + $0x28] sm:$0xff]
  %v208 = vld [vmem:[%s3 + $0x30] sm:$0xff]
  %v209 = vld [vmem:[%s3 + $0x38] sm:$0xff]
  %v210 = vld [vmem:[%s3 + $0x40] sm:$0xff]
  %v211 = vld [vmem:[%s3 + $0x48] sm:$0xff]
  %v212 = vld [vmem:[%s3 + $0x50] sm:$0xff]
  %v213 = vld [vmem:[%s3 + $0x58] sm:$0xff]
  %v214 = vld [vmem:[%s3 + $0x60] sm:$0xff]
  %v215 = vld [vmem:[%s3 + $0x68] sm:$0xff]
  %v216 = vld [vmem:[%s3 + $0x70] sm:$0xff]
  %v217 = vld [vmem:[%s3 + $0x78] sm:$0xff]
  %218 = vmatpush.msra.mxu0 %v217
  %219 = vmatpush.msra.mxu0 %v216
  %220 = vmatpush.msra.mxu0 %v215
  %221 = vmatpush.msra.mxu0 %v214
  %222 = vmatpush.msra.mxu0 %v213
  %223 = vmatpush.msra.mxu0 %v212
  %224 = vmatpush.msra.mxu0 %v211
  %225 = vmatpush.msra.mxu0 %v210
  %226 = vmatpush.msra.mxu0 %v209
  %227 = vmatpush.msra.mxu0 %v208
  %228 = vmatpush.msra.mxu0 %v207
  %229 = vmatpush.msra.mxu0 %v206
  %230 = vmatpush.msra.mxu0 %v205
  %231 = vmatpush.msra.mxu0 %v204
  %232 = vmatpush.msra.mxu0 %v203
  %233 = vmatpush.msra.mxu0 %v202
  %234 = vmatmul.f32.gmra.mxu0 %v201
  %v235 = vpop.f32.mrf.mxu0
  %v236 = vadd.f32 0.0, %v235
  %237 = vdwg.mxu0
  %v238 = vmul.f32 %v236, %v236
  %v240 = vrot.slane %v238, 7
  %v242 = vsub.f32 %v236, %v240
  %v243 = vmax.f32 %v242, 0.0
  %v244 = vld [vmem:[%s4] sm:$0x1]
  %v245 = vadd.f32 %v243, 1e-05
  %v246 = vrsqrt.pop %v245
  %v247 = vmul.f32 %v246, %v245
  %v248 = vmul.f32 %v247, %v246
  %v249 = vmul.f32 0.5, %v248
  %v250 = vsub.f32 1.5, %v249
  %v251 = vmul.f32 %v246, %v250
  %vm252 = vweird.f32 %v245
  %vm253 = vweird.f32 %v246
  %vm254 = vmor %vm252, %vm253
  %v255 = vsel %vm254, %v246, %v251
  %257 = vst [vmem:[#allocation1] sm:$0xff] %v255
  %s258 = scalar_lea.vmem [#allocation1], 1
  %v259 = vld [vmem:[%s258] ss:$9 sm:$0xff]
  %v261 = vmul.f32 %v244, %v259
  %v262 = vld [vmem:[%s5] sm:$0x1]
  %v263 = vmul.f32 %v236, %v261
  %v264 = vsub.f32 %v262, %v263
  %v266 = vperm.slane %v261, 0
  %v268 = vmul.f32 %v183, %v266
  %v269 = vmul.f32 %v184, %v266
  %v271 = vperm.slane %v264, 0
  %v273 = vadd.f32 %v268, %v271
  %v274 = vadd.f32 %v269, %v271
  %v275 = vmax.f32 %v273, 0.0
  %v276 = vmax.f32 %v274, 0.0
  %v279 = vrot.slane %v275, 7
  %v280 = vrot.slane %v276, 7
  %v283 = vsel %vm37, 0.0, %v279
  %v284 = vsel %vm37, 0.0, %v280
  %v285 = vsel %vm37, %v279, 0.0
  %v286 = vsel %vm37, %v280, 0.0
  %v287 = vld [vmem:[%s2] sm:$0xff]
  %v288 = vld [vmem:[%s2 + $0x8] sm:$0xff]
  %v289 = vld [vmem:[%s2 + $0x10] sm:$0xff]
  %v290 = vld [vmem:[%s2 + $0x18] sm:$0xff]
  %v291 = vld [vmem:[%s2 + $0x20] sm:$0xff]
  %v292 = vld [vmem:[%s2 + $0x28] sm:$0xff]
  %v293 = vld [vmem:[%s2 + $0x30] sm:$0xff]
  %v294 = vld [vmem:[%s2 + $0x38] sm:$0xff]
  %v295 = vld [vmem:[%s2 + $0x40] sm:$0xff]
  %v296 = vld [vmem:[%s2 + $0x48] sm:$0xff]
  %v297 = vld [vmem:[%s2 + $0x50] sm:$0xff]
  %v298 = vld [vmem:[%s2 + $0x58] sm:$0xff]
  %v299 = vld [vmem:[%s2 + $0x60] sm:$0xff]
  %v300 = vld [vmem:[%s2 + $0x68] sm:$0xff]
  %v301 = vld [vmem:[%s2 + $0x70] sm:$0xff]
  %v302 = vld [vmem:[%s2 + $0x78] sm:$0xff]
  %v307 = vrot.slane %v283, 1
  %v308 = vrot.slane %v285, 1
  %v309 = vsel %vm62, %v307, %v308
  %v310 = vrot.slane %v284, 1
  %v311 = vrot.slane %v286, 1
  %v312 = vsel %vm62, %v310, %v311
  %s315 = scalar_lea.vmem %s2, 128
  %v316 = vld [vmem:[%s315] sm:$0xff]
  %v317 = vld [vmem:[%s315 + $0x8] sm:$0xff]
  %v318 = vld [vmem:[%s315 + $0x10] sm:$0xff]
  %v319 = vld [vmem:[%s315 + $0x18] sm:$0xff]
  %v320 = vld [vmem:[%s315 + $0x20] sm:$0xff]
  %v321 = vld [vmem:[%s315 + $0x28] sm:$0xff]
  %v322 = vld [vmem:[%s315 + $0x30] sm:$0xff]
  %v323 = vld [vmem:[%s315 + $0x38] sm:$0xff]
  %v324 = vld [vmem:[%s315 + $0x40] sm:$0xff]
  %v325 = vld [vmem:[%s315 + $0x48] sm:$0xff]
  %v326 = vld [vmem:[%s315 + $0x50] sm:$0xff]
  %v327 = vld [vmem:[%s315 + $0x58] sm:$0xff]
  %v328 = vld [vmem:[%s315 + $0x60] sm:$0xff]
  %v329 = vld [vmem:[%s315 + $0x68] sm:$0xff]
  %v330 = vld [vmem:[%s315 + $0x70] sm:$0xff]
  %v331 = vld [vmem:[%s315 + $0x78] sm:$0xff]
  %332 = vmatpush.msra.mxu0 %v331
  %333 = vmatpush.msra.mxu0 %v330
  %334 = vmatpush.msra.mxu0 %v329
  %335 = vmatpush.msra.mxu0 %v328
  %336 = vmatpush.msra.mxu0 %v327
  %337 = vmatpush.msra.mxu0 %v326
  %338 = vmatpush.msra.mxu0 %v325
  %339 = vmatpush.msra.mxu0 %v324
  %340 = vmatpush.msra.mxu0 %v323
  %341 = vmatpush.msra.mxu0 %v322
  %342 = vmatpush.msra.mxu0 %v321
  %343 = vmatpush.msra.mxu0 %v320
  %344 = vmatpush.msra.mxu0 %v319
  %345 = vmatpush.msra.mxu0 %v318
  %346 = vmatpush.msra.mxu0 %v317
  %347 = vmatpush.msra.mxu0 %v316
  %348 = vmatmul.f32.gmra.mxu0 %v309
  %v349 = vpop.f32.mrf.mxu0
  %v350 = vadd.f32 0.0, %v349
  %351 = vmatmul.f32.gmra.mxu0 %v312
  %v352 = vpop.f32.mrf.mxu0
  %v353 = vadd.f32 0.0, %v352
  %354 = vdwg.mxu0
  %355 = vmatpush.msra.mxu0 %v302
  %356 = vmatpush.msra.mxu0 %v301
  %357 = vmatpush.msra.mxu0 %v300
  %358 = vmatpush.msra.mxu0 %v299
  %359 = vmatpush.msra.mxu0 %v298
  %360 = vmatpush.msra.mxu0 %v297
  %361 = vmatpush.msra.mxu0 %v296
  %362 = vmatpush.msra.mxu0 %v295
  %363 = vmatpush.msra.mxu0 %v294
  %364 = vmatpush.msra.mxu0 %v293
  %365 = vmatpush.msra.mxu0 %v292
  %366 = vmatpush.msra.mxu0 %v291
  %367 = vmatpush.msra.mxu0 %v290
  %368 = vmatpush.msra.mxu0 %v289
  %369 = vmatpush.msra.mxu0 %v288
  %370 = vmatpush.msra.mxu0 %v287
  %371 = vmatmul.f32.gmra.mxu0 %v283
  %v372 = vpop.f32.mrf.mxu0
  %v373 = vadd.f32 %v350, %v372
  %374 = vmatmul.f32.gmra.mxu0 %v284
  %v375 = vpop.f32.mrf.mxu0
  %v376 = vadd.f32 %v353, %v375
  %377 = vdwg.mxu0
  %v378 = vrot.slane %v283, 2
  %v379 = vrot.slane %v285, 2
  %v380 = vsel %vm134, %v378, %v379
  %v381 = vrot.slane %v284, 2
  %v382 = vrot.slane %v286, 2
  %v383 = vsel %vm134, %v381, %v382
  %s386 = scalar_lea.vmem %s2, 256
  %v387 = vld [vmem:[%s386] sm:$0xff]
  %v388 = vld [vmem:[%s386 + $0x8] sm:$0xff]
  %v389 = vld [vmem:[%s386 + $0x10] sm:$0xff]
  %v390 = vld [vmem:[%s386 + $0x18] sm:$0xff]
  %v391 = vld [vmem:[%s386 + $0x20] sm:$0xff]
  %v392 = vld [vmem:[%s386 + $0x28] sm:$0xff]
  %v393 = vld [vmem:[%s386 + $0x30] sm:$0xff]
  %v394 = vld [vmem:[%s386 + $0x38] sm:$0xff]
  %v395 = vld [vmem:[%s386 + $0x40] sm:$0xff]
  %v396 = vld [vmem:[%s386 + $0x48] sm:$0xff]
  %v397 = vld [vmem:[%s386 + $0x50] sm:$0xff]
  %v398 = vld [vmem:[%s386 + $0x58] sm:$0xff]
  %v399 = vld [vmem:[%s386 + $0x60] sm:$0xff]
  %v400 = vld [vmem:[%s386 + $0x68] sm:$0xff]
  %v401 = vld [vmem:[%s386 + $0x70] sm:$0xff]
  %v402 = vld [vmem:[%s386 + $0x78] sm:$0xff]
  %403 = vmatpush.msra.mxu0 %v402
  %404 = vmatpush.msra.mxu0 %v401
  %405 = vmatpush.msra.mxu0 %v400
  %406 = vmatpush.msra.mxu0 %v399
  %407 = vmatpush.msra.mxu0 %v398
  %408 = vmatpush.msra.mxu0 %v397
  %409 = vmatpush.msra.mxu0 %v396
  %410 = vmatpush.msra.mxu0 %v395
  %411 = vmatpush.msra.mxu0 %v394
  %412 = vmatpush.msra.mxu0 %v393
  %413 = vmatpush.msra.mxu0 %v392
  %414 = vmatpush.msra.mxu0 %v391
  %415 = vmatpush.msra.mxu0 %v390
  %416 = vmatpush.msra.mxu0 %v389
  %417 = vmatpush.msra.mxu0 %v388
  %418 = vmatpush.msra.mxu0 %v387
  %419 = vmatmul.f32.gmra.mxu0 %v380
  %v420 = vpop.f32.mrf.mxu0
  %v421 = vadd.f32 0.0, %v420
  %422 = vmatmul.f32.gmra.mxu0 %v383
  %v423 = vpop.f32.mrf.mxu0
  %v424 = vadd.f32 0.0, %v423
  %425 = vdwg.mxu0
  %v426 = vadd.f32 %v373, %v421
  %v427 = vadd.f32 %v376, %v424
  %v428 = vadd.f32 %v426, %v427
  %v429 = vrot.slane %v428, 4
  %v430 = vadd.f32 %v428, %v429
  %v431 = vrot.slane %v430, 2
  %v432 = vadd.f32 %v430, %v431
  %v433 = vrot.slane %v432, 1
  %v434 = vadd.f32 %v432, %v433
  %v435 = vmul.f32 %v426, %v426
  %v436 = vmul.f32 %v427, %v427
  %v437 = vadd.f32 %v435, %v436
  %v438 = vrot.slane %v437, 4
  %v439 = vadd.f32 %v437, %v438
  %v440 = vrot.slane %v439, 2
  %v441 = vadd.f32 %v439, %v440
  %v442 = vrot.slane %v441, 1
  %v443 = vadd.f32 %v441, %v442
  %v444 = vsel %vm37, %v434, %v443
  %445 = vmatpush.msra.mxu0 %v217
  %446 = vmatpush.msra.mxu0 %v216
  %447 = vmatpush.msra.mxu0 %v215
  %448 = vmatpush.msra.mxu0 %v214
  %449 = vmatpush.msra.mxu0 %v213
  %450 = vmatpush.msra.mxu0 %v212
  %451 = vmatpush.msra.mxu0 %v211
  %452 = vmatpush.msra.mxu0 %v210
  %453 = vmatpush.msra.mxu0 %v209
  %454 = vmatpush.msra.mxu0 %v208
  %455 = vmatpush.msra.mxu0 %v207
  %456 = vmatpush.msra.mxu0 %v206
  %457 = vmatpush.msra.mxu0 %v205
  %458 = vmatpush.msra.mxu0 %v204
  %459 = vmatpush.msra.mxu0 %v203
  %460 = vmatpush.msra.mxu0 %v202
  %461 = vmatmul.f32.gmra.mxu0 %v444
  %v462 = vpop.f32.mrf.mxu0
  %v463 = vadd.f32 0.0, %v462
  %464 = vdwg.mxu0
  %v465 = vmul.f32 %v463, %v463
  %v467 = vrot.slane %v465, 7
  %v469 = vsub.f32 %v463, %v467
  %v470 = vmax.f32 %v469, 0.0
  %v471 = vld [vmem:[%s6] sm:$0x1]
  %v472 = vadd.f32 %v470, 1e-05
  %v473 = vrsqrt.pop %v472
  %v474 = vmul.f32 %v473, %v472
  %v475 = vmul.f32 %v474, %v473
  %v476 = vmul.f32 0.5, %v475
  %v477 = vsub.f32 1.5, %v476
  %v478 = vmul.f32 %v473, %v477
  %vm479 = vweird.f32 %v472
  %vm480 = vweird.f32 %v473
  %vm481 = vmor %vm479, %vm480
  %v482 = vsel %vm481, %v473, %v478
  %484 = vst [vmem:[#allocation1] sm:$0xff] %v482
  %s485 = scalar_lea.vmem [#allocation1], 1
  %v486 = vld [vmem:[%s485] ss:$9 sm:$0xff]
  %v488 = vmul.f32 %v471, %v486
  %v489 = vld [vmem:[%s7] sm:$0x1]
  %v490 = vmul.f32 %v463, %v488
  %v491 = vsub.f32 %v489, %v490
  %v493 = vperm.slane %v488, 0
  %v495 = vmul.f32 %v426, %v493
  %v496 = vmul.f32 %v427, %v493
  %v498 = vperm.slane %v491, 0
  %v500 = vadd.f32 %v495, %v498
  %v501 = vadd.f32 %v496, %v498
  %v502 = vadd.f32 %v500, %v29
  %v503 = vadd.f32 %v501, %v30
  %v504 = vmax.f32 %v502, 0.0
  %v505 = vmax.f32 %v503, 0.0
  %506 = vst [vmem:[%s8] sm:$0xff] %v504
  %507 = vst [vmem:[%s8 + $0x8] sm:$0xff] %v505
  // Predicated region
  $region34: #{resblock_nchw.1} parent=0 // pred_check
    _
  $region35: #{resblock_nchw.1} parent=0 // pred_check_branch
    %509 = sbr.rel (0) target = $region37
  $region36: #{resblock_nchw.1} parent=0 // pred_region
    _
  $region37: #{resblock_nchw.1} parent=0 // pred_fallthru
    _
  // Predicated region
  $region38: #{resblock_nchw.1} parent=0 // pred_check
    _
  $region39: #{resblock_nchw.1} parent=0 // pred_check_branch
    %511 = sbr.rel (0) target = $region41
  $region40: #{resblock_nchw.1} parent=0 // pred_region
    _
  $region41: #{resblock_nchw.1} parent=0 // pred_fallthru
    _

</llo_original>
